<compile_context>
chip_gen: v5e
topology: v5e:2x2
jax: 0.10.0
libtpu: 0.0.40
codegen_flags: <defaults>
</compile_context>

<pallas_src>
import functools

import jax
import jax.numpy as jnp
from jax.experimental import pallas as pl
from jax.experimental.pallas import tpu as pltpu


def nfm_kernel(fc_b_ref, x_ref, fcw_ref, vt_ref, v2t_ref, mlpwt_ref,
               mlpb_ref, hw_ref, o_ref):
    x = x_ref[...]                                   # (TB, D) compute dtype
    xf = x.astype(jnp.float32)                       # f32 copy for VPU math

    # fm_linear_part = fc(x): N=1 matmul -> VPU multiply + lane reduction.
    fm_linear = jnp.sum(xf * fcw_ref[...], axis=-1)  # (TB,)

    # fm_interactions_1 = (x @ V^T)^2                 -> (TB, H)
    t1 = jnp.dot(x, vt_ref[...], preferred_element_type=jnp.float32)
    fi1 = t1 * t1                                    # f32 elementwise

    # fm_interactions_2 = (x^2) @ (V^2)^T             -> (TB, H)
    x2 = (xf * xf).astype(x.dtype)                   # square in f32, cast for MXU
    fi2 = jnp.dot(x2, v2t_ref[...], preferred_element_type=jnp.float32)

    # 0.5 scale is folded into mlp weights in the wrapper.
    bilinear = fi1 - fi2                             # (TB, H) f32

    # out = relu(mlp(0.5 * bilinear))                 -> (TB, H)
    hidden = jnp.dot(bilinear.astype(mlpwt_ref.dtype), mlpwt_ref[...],
                     preferred_element_type=jnp.float32)
    hidden = jnp.maximum(hidden + mlpb_ref[...], 0.0)

    # dropout -> identity (inference)
    # final head h(out): N=1 matmul -> VPU multiply + lane reduction.
    head = jnp.sum(hidden * hw_ref[...], axis=-1)    # (TB,)

    out = head + fm_linear + fc_b_ref[0]             # (TB,)
    # Lane-dense store: batch elements along lanes.
    o_ref[...] = out[None, :].astype(o_ref.dtype)    # (1, TB)


@functools.partial(jax.jit, static_argnames=("block_b", "compute_dtype"))
def nfm_forward(x, fc_w, fc_b, fm_V, mlp_w, mlp_b, h_w, *,
                block_b=128, compute_dtype=jnp.bfloat16):
    B, D = x.shape
    H = fm_V.shape[0]

    # Pad batch to a multiple of the batch tile.
    grid_b = pl.cdiv(B, block_b)
    b_pad = grid_b * block_b
    if b_pad != B:
        x = jnp.pad(x, ((0, b_pad - B), (0, 0)))

    # One-time parameter prep (constant folding, outside the hot path):
    #   pre-transpose weights, precompute V^2, fold the 0.5 bilinear scale
    #   into the mlp weights, downcast MXU operands.
    x_c = x.astype(compute_dtype)                            # (Bp, D)
    vt = fm_V.T.astype(compute_dtype)                        # (D, H)
    v2t = (fm_V * fm_V).T.astype(compute_dtype)              # (D, H)
    mlp_wt = (0.5 * mlp_w).T.astype(compute_dtype)           # (H, H)
    fc_w_r = fc_w.reshape(1, D).astype(jnp.float32)          # (1, D)
    mlp_b_r = mlp_b.reshape(1, H).astype(jnp.float32)        # (1, H)
    h_w_r = h_w.reshape(1, H).astype(jnp.float32)            # (1, H)
    fc_b_r = fc_b.reshape(1).astype(jnp.float32)             # (1,) scalar

    out = pl.pallas_call(
        nfm_kernel,
        out_shape=jax.ShapeDtypeStruct((1, b_pad), jnp.float32),
        grid=(grid_b,),
        in_specs=[
            pl.BlockSpec(memory_space=pltpu.SMEM),            # fc_b (scalar)
            pl.BlockSpec((block_b, D), lambda i: (i, 0)),     # x tile
            pl.BlockSpec((1, D), lambda i: (0, 0)),           # fc_w   (resident)
            pl.BlockSpec((D, H), lambda i: (0, 0)),           # V^T    (resident)
            pl.BlockSpec((D, H), lambda i: (0, 0)),           # (V^2)^T(resident)
            pl.BlockSpec((H, H), lambda i: (0, 0)),           # mlp_w^T(resident)
            pl.BlockSpec((1, H), lambda i: (0, 0)),           # mlp_b  (resident)
            pl.BlockSpec((1, H), lambda i: (0, 0)),           # h_w    (resident)
        ],
        out_specs=pl.BlockSpec((1, block_b), lambda i: (0, i)),
        compiler_params=pltpu.CompilerParams(
            dimension_semantics=("parallel",)),
    )(fc_b_r, x_c, fc_w_r, vt, v2t, mlp_wt, mlp_b_r, h_w_r)

    return out[0, :B].reshape(B, 1)


def nfm_reference(x, fc_w, fc_b, fm_V, mlp_w, mlp_b, h_w):
    fm_linear = x @ fc_w.T + fc_b.reshape(1, 1)
    fi1 = (x @ fm_V.T) ** 2
    fi2 = (x ** 2) @ (fm_V ** 2).T
    bilinear = 0.5 * (fi1 - fi2)
    hidden = jnp.maximum(bilinear @ mlp_w.T + mlp_b.reshape(1, -1), 0.0)
    return hidden @ h_w.T + fm_linear


if __name__ == "__main__":
    B, D = 256, 32
    H = int(D * 0.5)

    key = jax.random.PRNGKey(0)
    k_x, k_fcw, k_fmv, k_mlpw, k_mlpb, k_hw = jax.random.split(key, 6)

    x = jax.random.normal(k_x, (B, D), dtype=jnp.float32)

    # Deterministic init mirroring NFM.init_weight():
    fc_w = jax.random.uniform(k_fcw, (1, D), minval=-0.1, maxval=0.1,
                              dtype=jnp.float32)
    fc_b = jnp.full((1,), 0.1, dtype=jnp.float32)
    fm_V = jax.random.uniform(k_fmv, (H, D), minval=-0.1, maxval=0.1,
                              dtype=jnp.float32)
    # mlp uses PyTorch default Linear init (uniform(-1/sqrt(H), 1/sqrt(H)))
    bound = 1.0 / (H ** 0.5)
    mlp_w = jax.random.uniform(k_mlpw, (H, H), minval=-bound, maxval=bound,
                               dtype=jnp.float32)
    mlp_b = jax.random.uniform(k_mlpb, (H,), minval=-bound, maxval=bound,
                               dtype=jnp.float32)
    h_w = jax.random.uniform(k_hw, (1, H), minval=-0.1, maxval=0.1,
                             dtype=jnp.float32)

    ref = nfm_reference(x, fc_w, fc_b, fm_V, mlp_w, mlp_b, h_w)

    # f32 MXU path: exact semantics check against the reference.
    out_f32 = nfm_forward(x, fc_w, fc_b, fm_V, mlp_w, mlp_b, h_w,
                          compute_dtype=jnp.float32)
    out_f32 = jax.block_until_ready(out_f32)
    assert out_f32.shape == (B, 1)
    assert jnp.allclose(out_f32, ref, atol=1e-4, rtol=1e-4)

    # bf16 MXU path (default, for v6e/v7x throughput): looser tolerance.
    out_bf16 = nfm_forward(x, fc_w, fc_b, fm_V, mlp_w, mlp_b, h_w,
                           compute_dtype=jnp.bfloat16)
    out_bf16 = jax.block_until_ready(out_bf16)
    assert out_bf16.shape == (B, 1)
    assert jnp.allclose(out_bf16, ref, atol=2e-2, rtol=2e-2)

    print("KERNEL_OK")
</pallas_src>

<mosaic_0001>
module attributes {stable_mosaic.version = 11 : i64} {
  func.func @nfm_kernel(%arg0: i32, %arg1: memref<1xf32, #tpu.memory_space<smem>>, %arg2: memref<128x32xf32, #tpu.memory_space<vmem>>, %arg3: memref<1x32xf32, #tpu.memory_space<vmem>>, %arg4: memref<32x16xf32, #tpu.memory_space<vmem>>, %arg5: memref<32x16xf32, #tpu.memory_space<vmem>>, %arg6: memref<16x16xf32, #tpu.memory_space<vmem>>, %arg7: memref<1x16xf32, #tpu.memory_space<vmem>>, %arg8: memref<1x16xf32, #tpu.memory_space<vmem>>, %arg9: memref<1x128xf32, #tpu.memory_space<vmem>>) attributes {dimension_semantics = [#tpu.dimension_semantics<parallel>], iteration_bounds = array<i64: 2>, scalar_prefetch = 0 : i64, scratch_operands = 0 : i64, tpu.core_type = #tpu.core_type<tc>, window_params = [{transform_indices = @transform_0, window_bounds = array<i64: 1>}, {transform_indices = @transform_1, window_bounds = array<i64: 128, 32>}, {pipeline_mode = #tpu.pipeline_mode<synchronous>, transform_indices = @transform_2, window_bounds = array<i64: 1, 32>}, {pipeline_mode = #tpu.pipeline_mode<synchronous>, transform_indices = @transform_3, window_bounds = array<i64: 32, 16>}, {pipeline_mode = #tpu.pipeline_mode<synchronous>, transform_indices = @transform_4, window_bounds = array<i64: 32, 16>}, {pipeline_mode = #tpu.pipeline_mode<synchronous>, transform_indices = @transform_5, window_bounds = array<i64: 16, 16>}, {pipeline_mode = #tpu.pipeline_mode<synchronous>, transform_indices = @transform_6, window_bounds = array<i64: 1, 16>}, {pipeline_mode = #tpu.pipeline_mode<synchronous>, transform_indices = @transform_7, window_bounds = array<i64: 1, 16>}, {transform_indices = @transform_8, window_bounds = array<i64: 1, 128>}]} {
    %c0 = arith.constant 0 : index
    %c0_0 = arith.constant 0 : index
    %0 = vector.load %arg2[%c0, %c0_0] : memref<128x32xf32, #tpu.memory_space<vmem>>, vector<128x32xf32>
    %c0_1 = arith.constant 0 : index
    %c0_2 = arith.constant 0 : index
    %1 = vector.load %arg3[%c0_1, %c0_2] : memref<1x32xf32, #tpu.memory_space<vmem>>, vector<1x32xf32>
    %2 = vector.broadcast %1 : vector<1x32xf32> to vector<128x32xf32>
    %3 = arith.mulf %0, %2 : vector<128x32xf32>
    %cst = arith.constant dense<0.000000e+00> : vector<128xf32>
    %4 = vector.multi_reduction <add>, %3, %cst [1] : vector<128x32xf32> to vector<128xf32>
    %c0_3 = arith.constant 0 : index
    %c0_4 = arith.constant 0 : index
    %5 = vector.load %arg4[%c0_3, %c0_4] : memref<32x16xf32, #tpu.memory_space<vmem>>, vector<32x16xf32>
    %cst_5 = arith.constant dense<0.000000e+00> : vector<128x16xf32>
    %6 = tpu.matmul %0, %5, %cst_5 {dimension_numbers = #tpu.dot_dimension_numbers<[1], [0], [0], [1], [0, 0, 1, 1], [], []>} : vector<128x32xf32>, vector<32x16xf32>, vector<128x16xf32> -> vector<128x16xf32>
    %7 = arith.mulf %6, %6 : vector<128x16xf32>
    %8 = arith.mulf %0, %0 : vector<128x32xf32>
    %c0_6 = arith.constant 0 : index
    %c0_7 = arith.constant 0 : index
    %9 = vector.load %arg5[%c0_6, %c0_7] : memref<32x16xf32, #tpu.memory_space<vmem>>, vector<32x16xf32>
    %cst_8 = arith.constant dense<0.000000e+00> : vector<128x16xf32>
    %10 = tpu.matmul %8, %9, %cst_8 {dimension_numbers = #tpu.dot_dimension_numbers<[1], [0], [0], [1], [0, 0, 1, 1], [], []>} : vector<128x32xf32>, vector<32x16xf32>, vector<128x16xf32> -> vector<128x16xf32>
    %11 = arith.subf %7, %10 : vector<128x16xf32>
    %c0_9 = arith.constant 0 : index
    %c0_10 = arith.constant 0 : index
    %12 = vector.load %arg6[%c0_9, %c0_10] : memref<16x16xf32, #tpu.memory_space<vmem>>, vector<16x16xf32>
    %cst_11 = arith.constant dense<0.000000e+00> : vector<128x16xf32>
    %13 = tpu.matmul %11, %12, %cst_11 {dimension_numbers = #tpu.dot_dimension_numbers<[1], [0], [0], [1], [0, 0, 1, 1], [], []>} : vector<128x16xf32>, vector<16x16xf32>, vector<128x16xf32> -> vector<128x16xf32>
    %c0_12 = arith.constant 0 : index
    %c0_13 = arith.constant 0 : index
    %14 = vector.load %arg7[%c0_12, %c0_13] : memref<1x16xf32, #tpu.memory_space<vmem>>, vector<1x16xf32>
    %15 = vector.broadcast %14 : vector<1x16xf32> to vector<128x16xf32>
    %16 = arith.addf %13, %15 : vector<128x16xf32>
    %cst_14 = arith.constant 0.000000e+00 : f32
    %17 = vector.broadcast %cst_14 : f32 to vector<128x16xf32>
    %18 = arith.maximumf %16, %17 : vector<128x16xf32>
    %c0_15 = arith.constant 0 : index
    %c0_16 = arith.constant 0 : index
    %19 = vector.load %arg8[%c0_15, %c0_16] : memref<1x16xf32, #tpu.memory_space<vmem>>, vector<1x16xf32>
    %20 = vector.broadcast %19 : vector<1x16xf32> to vector<128x16xf32>
    %21 = arith.mulf %18, %20 : vector<128x16xf32>
    %cst_17 = arith.constant dense<0.000000e+00> : vector<128xf32>
    %22 = vector.multi_reduction <add>, %21, %cst_17 [1] : vector<128x16xf32> to vector<128xf32>
    %23 = arith.addf %22, %4 : vector<128xf32>
    %c0_18 = arith.constant 0 : index
    %24 = memref.load %arg1[%c0_18] : memref<1xf32, #tpu.memory_space<smem>>
    %25 = vector.broadcast %24 : f32 to vector<128xf32>
    %26 = arith.addf %23, %25 : vector<128xf32>
    %27 = vector.shape_cast %26 : vector<128xf32> to vector<1x128xf32>
    %c0_19 = arith.constant 0 : index
    %c0_20 = arith.constant 0 : index
    %28 = vector.load %arg9[%c0_19, %c0_20] : memref<1x128xf32, #tpu.memory_space<vmem>>, vector<1x128xf32>
    tpu.vector_store %arg9[%c0_19, %c0_20], %27 {strides = array<i32>} : memref<1x128xf32, #tpu.memory_space<vmem>>, vector<1x128xf32>,
    return
  }
  func.func @transform_0(%arg0: i32) -> i32 {
    %c0_i32 = arith.constant 0 : i32
    %c0_i32_0 = arith.constant 0 : i32
    return %c0_i32 : i32
  }
  func.func @transform_1(%arg0: i32) -> (i32, i32) {
    %c0_i32 = arith.constant 0 : i32
    %c0_i32_0 = arith.constant 0 : i32
    return %arg0, %c0_i32 : i32, i32
  }
  func.func @transform_2(%arg0: i32) -> (i32, i32) {
    %c0_i32 = arith.constant 0 : i32
    %c0_i32_0 = arith.constant 0 : i32
    %c0_i32_1 = arith.constant 0 : i32
    return %c0_i32, %c0_i32_0 : i32, i32
  }
  func.func @transform_3(%arg0: i32) -> (i32, i32) {
    %c0_i32 = arith.constant 0 : i32
    %c0_i32_0 = arith.constant 0 : i32
    %c0_i32_1 = arith.constant 0 : i32
    return %c0_i32, %c0_i32_0 : i32, i32
  }
  func.func @transform_4(%arg0: i32) -> (i32, i32) {
    %c0_i32 = arith.constant 0 : i32
    %c0_i32_0 = arith.constant 0 : i32
    %c0_i32_1 = arith.constant 0 : i32
    return %c0_i32, %c0_i32_0 : i32, i32
  }
  func.func @transform_5(%arg0: i32) -> (i32, i32) {
    %c0_i32 = arith.constant 0 : i32
    %c0_i32_0 = arith.constant 0 : i32
    %c0_i32_1 = arith.constant 0 : i32
    return %c0_i32, %c0_i32_0 : i32, i32
  }
  func.func @transform_6(%arg0: i32) -> (i32, i32) {
    %c0_i32 = arith.constant 0 : i32
    %c0_i32_0 = arith.constant 0 : i32
    %c0_i32_1 = arith.constant 0 : i32
    return %c0_i32, %c0_i32_0 : i32, i32
  }
  func.func @transform_7(%arg0: i32) -> (i32, i32) {
    %c0_i32 = arith.constant 0 : i32
    %c0_i32_0 = arith.constant 0 : i32
    %c0_i32_1 = arith.constant 0 : i32
    return %c0_i32, %c0_i32_0 : i32, i32
  }
  func.func @transform_8(%arg0: i32) -> (i32, i32) {
    %c0_i32 = arith.constant 0 : i32
    %c0_i32_0 = arith.constant 0 : i32
    return %c0_i32, %arg0 : i32, i32
  }
}

</mosaic_0001>

<llo_original>
// kernel: mul.4
$region0: #{mul.4}
  #allocation0 [shape = 's32[1]{0}', space=sflag, size = 0x4, scoped, tag = 'scoped memory for mul.4']
  %s0 = inlined_call_operand.vmem [shape: f32[16,32], index: 0, kind: input, shape index: {}, may-alias: {0,1}]
  %s1 = inlined_call_operand.vmem [shape: f32[16,32], index: 1, kind: input, shape index: {}, may-alias: {0,1}]
  %s2 = inlined_call_operand.vmem [shape: f32[16,32], index: 2, kind: output, shape index: {}]
  %v3 = vld [vmem:[%s0] sm:$0xff]
  %v4 = vld [vmem:[%s1] sm:$0xff]
  %5 = xla_tuple %v3, %v4
  %6 = xla_tuple %5
  %v7 = vmul.f32 %v3, %v4
  %8 = xla_tuple %v7
  %9 = vst [vmem:[%s2] sm:$0xff] %v7
  %s10 = scalar_lea.vmem %s0, 8
  %v11 = vld [vmem:[%s10] sm:$0xff]
  %s12 = scalar_lea.vmem %s1, 8
  %v13 = vld [vmem:[%s12] sm:$0xff]
  %14 = xla_tuple %v11, %v13
  %15 = xla_tuple %14
  %v16 = vmul.f32 %v11, %v13
  %17 = xla_tuple %v16
  %s18 = scalar_lea.vmem %s2, 8
  %19 = vst [vmem:[%s18] sm:$0xff] %v16

// kernel: nfm_forward.1
$region0: #{nfm_forward.1}
  #allocation0 [shape = 'u32[]', space=smem, size = 0x4, offset = 0x4, fixed_abs, tag = 'smem constant byte address 0x4 - core index']
  #allocation1 [shape = 'u32[72,128]{1,0:T(1,128)}', space=vmem, size = 0x9000, scoped, tag = 'internal scratch']
  #allocation2 [shape = 'f32[1]{0:T(128)S(6)}', space=smem, size = 0x200, scoped, tag = 'scoped memory for nfm_forward.1']
  %s0 = inlined_call_operand.<no memory space> [shape: f32[1], index: 0, kind: input, shape index: {}]
  %s1 = inlined_call_operand.vmem [shape: f32[256,32], index: 1, kind: input, shape index: {}]
  %s2 = inlined_call_operand.vmem [shape: f32[1,32], index: 2, kind: input, shape index: {}]
  %s3 = inlined_call_operand.vmem [shape: f32[32,16], index: 3, kind: input, shape index: {}]
  %s4 = inlined_call_operand.vmem [shape: f32[32,16], index: 4, kind: input, shape index: {}]
  %s5 = inlined_call_operand.vmem [shape: f32[16,16], index: 5, kind: input, shape index: {}]
  %s6 = inlined_call_operand.vmem [shape: f32[1,16], index: 6, kind: input, shape index: {}]
  %s7 = inlined_call_operand.vmem [shape: f32[1,16], index: 7, kind: input, shape index: {}]
  %s8 = inlined_call_operand.hbm [shape: f32[1,256], index: 8, kind: output, shape index: {}]
  %s9 = sld [smem:[#allocation0]]
  $region65: #{nfm_forward.1} parent=0
    _
  %s11 = ssub.s32 1, %s9
  %s12 = scalar_select 0, %s11, %s9
  %13 = sst [smem:[#allocation2]] %s0
  $region1: #{nfm_forward.1} parent=0
    #allocation3 [shape = 'u8[1024]{0}', space=vmem, size = 0x400, scoped, tag = 'output window, operand 0']
    #allocation4 [shape = 's32[2]{0}', space=sflag, size = 0x8, scoped, tag = 'scoped memory for nfm_forward.1']
    %14 = vsyncpa [#allocation4], 0
    %s15 = scalar_lea.sflag [#allocation4], 1
    %16 = vsyncpa %s15, 0
    loop: start=0, step=1, limit=4
    $region2: #{nfm_forward.1} parent=1 // loop_pre_header
      _
    $region3: #{nfm_forward.1} parent=1 // loop_header
      %s18 = sphi 0, %s22
      %p19 = scmp.ge.s32.totalorder %s18, 4
      %s26 = sphi 0, %s26
      %s28 = sphi 0, %s26
      %s29 = sphi 0, %s28
      %s43 = sphi 0, %s29
      %s49 = sphi 0, %s51
      %s52 = sphi 0, %s49
      %s53 = sphi 0, %s52
      %s69 = sphi 0, %s53
      %s73 = sphi 0, %s73
      %s75 = sphi 0, %s73
      %s76 = sphi 0, %s75
      %s90 = sphi 0, %s76
      %s94 = sphi 0, %s94
      %s96 = sphi 0, %s94
      %s97 = sphi 0, %s96
      %s111 = sphi 0, %s97
      %s115 = sphi 0, %s115
      %s117 = sphi 0, %s115
      %s118 = sphi 0, %s117
      %s132 = sphi 0, %s118
      %s136 = sphi 0, %s136
      %s138 = sphi 0, %s136
      %s139 = sphi 0, %s138
      %s153 = sphi 0, %s139
      %s157 = sphi 0, %s157
      %s159 = sphi 0, %s157
      %s160 = sphi 0, %s159
      %s174 = sphi 0, %s160
      %s178 = sphi 0, %s178
      %s180 = sphi 0, %s178
      %s181 = sphi 0, %s180
      %s195 = sphi 0, %s181
      %s201 = sphi 0, %s203
      %s204 = sphi 0, %s201
      %s205 = sphi 0, %s204
      %s221 = sphi 0, %s205
    $region4: #{nfm_forward.1} parent=1 // loop_header_branch
      %21 = sbr.rel (%p19) target = $region8
    $region5: #{nfm_forward.1} parent=1 // loop_body
      %s23 = ssub.s32 %s18, 1
      %s24 = ssub.s32 %s18, 2
      %s25 = sadd.s32 %s18, 1
      %s27 = sadd.s32 %s26, 1
      %p30 = scmp.eq.s32.totalorder %s18, 1
      %p31 = scmp.ne.s32.totalorder %s26, %s28
      %p32 = scmp.eq.s32.totalorder %s18, 0
      %p33 = por %p31, %p32
      %p34 = scmp.ne.s32.totalorder %s26, %s28
      %p35 = scmp.eq.s32.totalorder %s23, 1
      %p36 = por %p34, %p35
      %p37 = scmp.ne.s32.totalorder %s28, %s29
      %p38 = scmp.eq.s32.totalorder %s23, 0
      %p39 = por %p37, %p38
      %p40 = scmp.ne.s32.totalorder %s28, %s29
      %p41 = scmp.eq.s32.totalorder %s24, 1
      %p42 = por %p40, %p41
      %p44 = scmp.ne.s32.totalorder %s29, %s43
      %p45 = scmp.eq.s32.totalorder %s24, 0
      %p46 = por %p44, %p45
      %s47 = ssub.s32 %s18, %s25
      %p48 = scmp.eq.s32.totalorder %s47, 0
      %s50 = sadd.s32 %s49, 1
      %s51 = scalar_select %p48, %s49, %s50
      %p54 = pneg %p48
      %p55 = scmp.eq.s32.totalorder %s18, 1
      %p56 = por %p54, %p55
      %p57 = scmp.ne.s32.totalorder %s49, %s52
      %p58 = scmp.eq.s32.totalorder %s18, 0
      %p59 = por %p57, %p58
      %p60 = scmp.ne.s32.totalorder %s49, %s52
      %p61 = scmp.eq.s32.totalorder %s23, 1
      %p62 = por %p60, %p61
      %p63 = scmp.ne.s32.totalorder %s52, %s53
      %p64 = scmp.eq.s32.totalorder %s23, 0
      %p65 = por %p63, %p64
      %p66 = scmp.ne.s32.totalorder %s52, %s53
      %p67 = scmp.eq.s32.totalorder %s24, 1
      %p68 = por %p66, %p67
      %p70 = scmp.ne.s32.totalorder %s53, %s69
      %p71 = scmp.eq.s32.totalorder %s24, 0
      %p72 = por %p70, %p71
      %s74 = sadd.s32 %s73, 1
      %p77 = scmp.eq.s32.totalorder %s18, 1
      %p78 = scmp.ne.s32.totalorder %s73, %s75
      %p79 = scmp.eq.s32.totalorder %s18, 0
      %p80 = por %p78, %p79
      %p81 = scmp.ne.s32.totalorder %s73, %s75
      %p82 = scmp.eq.s32.totalorder %s23, 1
      %p83 = por %p81, %p82
      %p84 = scmp.ne.s32.totalorder %s75, %s76
      %p85 = scmp.eq.s32.totalorder %s23, 0
      %p86 = por %p84, %p85
      %p87 = scmp.ne.s32.totalorder %s75, %s76
      %p88 = scmp.eq.s32.totalorder %s24, 1
      %p89 = por %p87, %p88
      %p91 = scmp.ne.s32.totalorder %s76, %s90
      %p92 = scmp.eq.s32.totalorder %s24, 0
      %p93 = por %p91, %p92
      %s95 = sadd.s32 %s94, 1
      %p98 = scmp.eq.s32.totalorder %s18, 1
      %p99 = scmp.ne.s32.totalorder %s94, %s96
      %p100 = scmp.eq.s32.totalorder %s18, 0
      %p101 = por %p99, %p100
      %p102 = scmp.ne.s32.totalorder %s94, %s96
      %p103 = scmp.eq.s32.totalorder %s23, 1
      %p104 = por %p102, %p103
      %p105 = scmp.ne.s32.totalorder %s96, %s97
      %p106 = scmp.eq.s32.totalorder %s23, 0
      %p107 = por %p105, %p106
      %p108 = scmp.ne.s32.totalorder %s96, %s97
      %p109 = scmp.eq.s32.totalorder %s24, 1
      %p110 = por %p108, %p109
      %p112 = scmp.ne.s32.totalorder %s97, %s111
      %p113 = scmp.eq.s32.totalorder %s24, 0
      %p114 = por %p112, %p113
      %s116 = sadd.s32 %s115, 1
      %p119 = scmp.eq.s32.totalorder %s18, 1
      %p120 = scmp.ne.s32.totalorder %s115, %s117
      %p121 = scmp.eq.s32.totalorder %s18, 0
      %p122 = por %p120, %p121
      %p123 = scmp.ne.s32.totalorder %s115, %s117
      %p124 = scmp.eq.s32.totalorder %s23, 1
      %p125 = por %p123, %p124
      %p126 = scmp.ne.s32.totalorder %s117, %s118
      %p127 = scmp.eq.s32.totalorder %s23, 0
      %p128 = por %p126, %p127
      %p129 = scmp.ne.s32.totalorder %s117, %s118
      %p130 = scmp.eq.s32.totalorder %s24, 1
      %p131 = por %p129, %p130
      %p133 = scmp.ne.s32.totalorder %s118, %s132
      %p134 = scmp.eq.s32.totalorder %s24, 0
      %p135 = por %p133, %p134
      %s137 = sadd.s32 %s136, 1
      %p140 = scmp.eq.s32.totalorder %s18, 1
      %p141 = scmp.ne.s32.totalorder %s136, %s138
      %p142 = scmp.eq.s32.totalorder %s18, 0
      %p143 = por %p141, %p142
      %p144 = scmp.ne.s32.totalorder %s136, %s138
      %p145 = scmp.eq.s32.totalorder %s23, 1
      %p146 = por %p144, %p145
      %p147 = scmp.ne.s32.totalorder %s138, %s139
      %p148 = scmp.eq.s32.totalorder %s23, 0
      %p149 = por %p147, %p148
      %p150 = scmp.ne.s32.totalorder %s138, %s139
      %p151 = scmp.eq.s32.totalorder %s24, 1
      %p152 = por %p150, %p151
      %p154 = scmp.ne.s32.totalorder %s139, %s153
      %p155 = scmp.eq.s32.totalorder %s24, 0
      %p156 = por %p154, %p155
      %s158 = sadd.s32 %s157, 1
      %p161 = scmp.eq.s32.totalorder %s18, 1
      %p162 = scmp.ne.s32.totalorder %s157, %s159
      %p163 = scmp.eq.s32.totalorder %s18, 0
      %p164 = por %p162, %p163
      %p165 = scmp.ne.s32.totalorder %s157, %s159
      %p166 = scmp.eq.s32.totalorder %s23, 1
      %p167 = por %p165, %p166
      %p168 = scmp.ne.s32.totalorder %s159, %s160
      %p169 = scmp.eq.s32.totalorder %s23, 0
      %p170 = por %p168, %p169
      %p171 = scmp.ne.s32.totalorder %s159, %s160
      %p172 = scmp.eq.s32.totalorder %s24, 1
      %p173 = por %p171, %p172
      %p175 = scmp.ne.s32.totalorder %s160, %s174
      %p176 = scmp.eq.s32.totalorder %s24, 0
      %p177 = por %p175, %p176
      %s179 = sadd.s32 %s178, 1
      %p182 = scmp.eq.s32.totalorder %s18, 1
      %p183 = scmp.ne.s32.totalorder %s178, %s180
      %p184 = scmp.eq.s32.totalorder %s18, 0
      %p185 = por %p183, %p184
      %p186 = scmp.ne.s32.totalorder %s178, %s180
      %p187 = scmp.eq.s32.totalorder %s23, 1
      %p188 = por %p186, %p187
      %p189 = scmp.ne.s32.totalorder %s180, %s181
      %p190 = scmp.eq.s32.totalorder %s23, 0
      %p191 = por %p189, %p190
      %p192 = scmp.ne.s32.totalorder %s180, %s181
      %p193 = scmp.eq.s32.totalorder %s24, 1
      %p194 = por %p192, %p193
      %p196 = scmp.ne.s32.totalorder %s181, %s195
      %p197 = scmp.eq.s32.totalorder %s24, 0
      %p198 = por %p196, %p197
      %s199 = ssub.s32 %s18, %s25
      %p200 = scmp.eq.s32.totalorder %s199, 0
      %s202 = sadd.s32 %s201, 1
      %s203 = scalar_select %p200, %s201, %s202
      %p206 = pneg %p200
      %p207 = scmp.eq.s32.totalorder %s18, 1
      %p208 = por %p206, %p207
      %p209 = scmp.ne.s32.totalorder %s201, %s204
      %p210 = scmp.eq.s32.totalorder %s18, 0
      %p211 = por %p209, %p210
      %p212 = scmp.ne.s32.totalorder %s201, %s204
      %p213 = scmp.eq.s32.totalorder %s23, 1
      %p214 = por %p212, %p213
      %p215 = scmp.ne.s32.totalorder %s204, %s205
      %p216 = scmp.eq.s32.totalorder %s23, 0
      %p217 = por %p215, %p216
      %p218 = scmp.ne.s32.totalorder %s204, %s205
      %p219 = scmp.eq.s32.totalorder %s24, 1
      %p220 = por %p218, %p219
      %p222 = scmp.ne.s32.totalorder %s205, %s221
      %p223 = scmp.eq.s32.totalorder %s24, 0
      %p224 = por %p222, %p223
      %p225 = scmp.le.s32.totalorder 1, %s18
      %p226 = scmp.lt.s32.totalorder %s18, 3
      %p227 = pnand %p225, %p226
      %p228 = pneg %p227
      // Predicated region
      $region9: #{nfm_forward.1} parent=5 // pred_check
        _
      $region10: #{nfm_forward.1} parent=5 // pred_check_branch
        %230 = sbr.rel (%p227) target = $region12
      $region11: #{nfm_forward.1} parent=5 // pred_region
        %s231 = ssub.s32 %s18, 1
        // Predicated region
        $region13: #{nfm_forward.1} parent=11 // pred_check
          %p232 = pneg %p39
        $region14: #{nfm_forward.1} parent=11 // pred_check_branch
          %234 = sbr.rel (%p232) target = $region16
        $region15: #{nfm_forward.1} parent=11 // pred_region
          _
        $region16: #{nfm_forward.1} parent=11 // pred_fallthru
          _
        // Predicated region
        $region17: #{nfm_forward.1} parent=11 // pred_check
          %p235 = pneg %p86
        $region18: #{nfm_forward.1} parent=11 // pred_check_branch
          %237 = sbr.rel (%p235) target = $region20
        $region19: #{nfm_forward.1} parent=11 // pred_region
          _
        $region20: #{nfm_forward.1} parent=11 // pred_fallthru
          _
        // Predicated region
        $region21: #{nfm_forward.1} parent=11 // pred_check
          %p238 = pneg %p107
        $region22: #{nfm_forward.1} parent=11 // pred_check_branch
          %240 = sbr.rel (%p238) target = $region24
        $region23: #{nfm_forward.1} parent=11 // pred_region
          _
        $region24: #{nfm_forward.1} parent=11 // pred_fallthru
          _
        // Predicated region
        $region25: #{nfm_forward.1} parent=11 // pred_check
          %p241 = pneg %p128
        $region26: #{nfm_forward.1} parent=11 // pred_check_branch
          %243 = sbr.rel (%p241) target = $region28
        $region27: #{nfm_forward.1} parent=11 // pred_region
          _
        $region28: #{nfm_forward.1} parent=11 // pred_fallthru
          _
        // Predicated region
        $region29: #{nfm_forward.1} parent=11 // pred_check
          %p244 = pneg %p149
        $region30: #{nfm_forward.1} parent=11 // pred_check_branch
          %246 = sbr.rel (%p244) target = $region32
        $region31: #{nfm_forward.1} parent=11 // pred_region
          _
        $region32: #{nfm_forward.1} parent=11 // pred_fallthru
          _
        // Predicated region
        $region33: #{nfm_forward.1} parent=11 // pred_check
          %p247 = pneg %p170
        $region34: #{nfm_forward.1} parent=11 // pred_check_branch
          %249 = sbr.rel (%p247) target = $region36
        $region35: #{nfm_forward.1} parent=11 // pred_region
          _
        $region36: #{nfm_forward.1} parent=11 // pred_fallthru
          _
        // Predicated region
        $region37: #{nfm_forward.1} parent=11 // pred_check
          %p250 = pneg %p191
        $region38: #{nfm_forward.1} parent=11 // pred_check_branch
          %252 = sbr.rel (%p250) target = $region40
        $region39: #{nfm_forward.1} parent=11 // pred_region
          _
        $region40: #{nfm_forward.1} parent=11 // pred_fallthru
          _
      $region12: #{nfm_forward.1} parent=5 // pred_fallthru
        _
      %p253 = scmp.lt.s32.totalorder %s18, 2
      // Predicated region
      $region41: #{nfm_forward.1} parent=5 // pred_check
        %p254 = pneg %p253
      $region42: #{nfm_forward.1} parent=5 // pred_check_branch
        %256 = sbr.rel (%p254) target = $region44
      $region43: #{nfm_forward.1} parent=5 // pred_region
        // Predicated region
        $region45: #{nfm_forward.1} parent=43 // pred_check
          %p257 = pneg %p59
        $region46: #{nfm_forward.1} parent=43 // pred_check_branch
          %259 = sbr.rel (%p257) target = $region48
        $region47: #{nfm_forward.1} parent=43 // pred_region
          %s260 = smul.u32 16, %s18
          %p261 = scmp.lt.s32.totalorder %s260, 31
          %s262 = scalar_select %p261, %s260, 31
          %s263 = smul.addr %s262, 8
          %s264 = scalar_lea.vmem %s1, %s263
          %s265 = smul.u32 16, %s18
        $region48: #{nfm_forward.1} parent=43 // pred_fallthru
          _
      $region44: #{nfm_forward.1} parent=5 // pred_fallthru
        _
      %p266 = scmp.le.s32.totalorder 1, %s18
      %p267 = scmp.lt.s32.totalorder %s18, 3
      %p268 = pnand %p266, %p267
      %p269 = pneg %p268
      // Predicated region
      $region49: #{nfm_forward.1} parent=5 // pred_check
        _
      $region50: #{nfm_forward.1} parent=5 // pred_check_branch
        %271 = sbr.rel (%p268) target = $region52
      $region51: #{nfm_forward.1} parent=5 // pred_region
        %s272 = ssub.s32 %s18, 1
        %p273 = pneg %p39
        %p274 = pneg %p36
        %s275 = smul.u32 16, %s23
        %p276 = scmp.lt.s32.totalorder %s275, 31
        %s277 = scalar_select %p276, %s275, 31
        %s278 = smul.addr %s277, 8
        %s279 = scalar_lea.vmem %s1, %s278
        %p280 = pneg %p65
        %p281 = pneg %p62
        %p282 = pneg %p86
        %p283 = pneg %p83
        %p284 = pneg %p107
        %p285 = pneg %p104
        %p286 = pneg %p128
        %p287 = pneg %p125
        %p288 = pneg %p149
        %p289 = pneg %p146
        %p290 = pneg %p170
        %p291 = pneg %p167
        %p292 = pneg %p191
        %p293 = pneg %p188
        %p294 = pneg %p217
        %p295 = pneg %p214
        %s296 = sand.u32 %s204, 1
        %s297 = scalar_lea.sflag [#allocation4], %s296
        %s298 = sand.u32 %s204, 1
        %s299 = scalar_lea.vmem [#allocation3], %s298
        %s300 = smul.u32 16, %s23
        %p301 = scmp.lt.s32.totalorder %s300, 31
        %s302 = scalar_select %p301, %s300, 31
        %s303 = smul.addr %s302, 8
        %s304 = scalar_lea.vmem %s1, %s303
        %s305 = smul.u32 16, %s23
        %v306 = vld [vmem:[%s304] sm:$0xff]
        %v307 = vld [vmem:[%s304 + $0x8] sm:$0xff]
        %v308 = vld [vmem:[%s304 + $0x10] sm:$0xff]
        %v309 = vld [vmem:[%s304 + $0x18] sm:$0xff]
        %v310 = vld [vmem:[%s304 + $0x20] sm:$0xff]
        %v311 = vld [vmem:[%s304 + $0x28] sm:$0xff]
        %v312 = vld [vmem:[%s304 + $0x30] sm:$0xff]
        %v313 = vld [vmem:[%s304 + $0x38] sm:$0xff]
        %v314 = vld [vmem:[%s304 + $0x40] sm:$0xff]
        %v315 = vld [vmem:[%s304 + $0x48] sm:$0xff]
        %v316 = vld [vmem:[%s304 + $0x50] sm:$0xff]
        %v317 = vld [vmem:[%s304 + $0x58] sm:$0xff]
        %v318 = vld [vmem:[%s304 + $0x60] sm:$0xff]
        %v319 = vld [vmem:[%s304 + $0x68] sm:$0xff]
        %v320 = vld [vmem:[%s304 + $0x70] sm:$0xff]
        %v321 = vld [vmem:[%s304 + $0x78] sm:$0xff]
        %v322 = vld [vmem:[%s2] sm:$0x1]
        %v324 = vperm.slane %v322, 0
        %v326 = vmul.f32 %v306, %v324
        %v327 = vmul.f32 %v307, %v324
        %v328 = vmul.f32 %v308, %v324
        %v329 = vmul.f32 %v309, %v324
        %v330 = vmul.f32 %v310, %v324
        %v331 = vmul.f32 %v311, %v324
        %v332 = vmul.f32 %v312, %v324
        %v333 = vmul.f32 %v313, %v324
        %v334 = vmul.f32 %v314, %v324
        %v335 = vmul.f32 %v315, %v324
        %v336 = vmul.f32 %v316, %v324
        %v337 = vmul.f32 %v317, %v324
        %v338 = vmul.f32 %v318, %v324
        %v339 = vmul.f32 %v319, %v324
        %v340 = vmul.f32 %v320, %v324
        %v341 = vmul.f32 %v321, %v324
        %vm342 = vcmask 261120
        %v343 = vsel %vm342, %v326, 0.0
        %344 = vadd.xlane.f32.xlu0 %v343
        %v345 = vpop.xlane.xlu0 %344
        %v346 = vsel %vm342, %v327, 0.0
        %347 = vadd.xlane.f32.xlu0 %v346
        %v348 = vpop.xlane.xlu0 %347
        %v349 = vsel %vm342, %v328, 0.0
        %350 = vadd.xlane.f32.xlu0 %v349
        %v351 = vpop.xlane.xlu0 %350
        %v352 = vsel %vm342, %v329, 0.0
        %353 = vadd.xlane.f32.xlu0 %v352
        %v354 = vpop.xlane.xlu0 %353
        %v355 = vsel %vm342, %v330, 0.0
        %356 = vadd.xlane.f32.xlu0 %v355
        %v357 = vpop.xlane.xlu0 %356
        %v358 = vsel %vm342, %v331, 0.0
        %359 = vadd.xlane.f32.xlu0 %v358
        %v360 = vpop.xlane.xlu0 %359
        %v361 = vsel %vm342, %v332, 0.0
        %362 = vadd.xlane.f32.xlu0 %v361
        %v363 = vpop.xlane.xlu0 %362
        %v364 = vsel %vm342, %v333, 0.0
        %365 = vadd.xlane.f32.xlu0 %v364
        %v366 = vpop.xlane.xlu0 %365
        %v367 = vsel %vm342, %v334, 0.0
        %368 = vadd.xlane.f32.xlu0 %v367
        %v369 = vpop.xlane.xlu0 %368
        %v370 = vsel %vm342, %v335, 0.0
        %371 = vadd.xlane.f32.xlu0 %v370
        %v372 = vpop.xlane.xlu0 %371
        %v373 = vsel %vm342, %v336, 0.0
        %374 = vadd.xlane.f32.xlu0 %v373
        %v375 = vpop.xlane.xlu0 %374
        %v376 = vsel %vm342, %v337, 0.0
        %377 = vadd.xlane.f32.xlu0 %v376
        %v378 = vpop.xlane.xlu0 %377
        %v379 = vsel %vm342, %v338, 0.0
        %380 = vadd.xlane.f32.xlu0 %v379
        %v381 = vpop.xlane.xlu0 %380
        %v382 = vsel %vm342, %v339, 0.0
        %383 = vadd.xlane.f32.xlu0 %v382
        %v384 = vpop.xlane.xlu0 %383
        %v385 = vsel %vm342, %v340, 0.0
        %386 = vadd.xlane.f32.xlu0 %v385
        %v387 = vpop.xlane.xlu0 %386
        %v388 = vsel %vm342, %v341, 0.0
        %389 = vadd.xlane.f32.xlu0 %v388
        %v390 = vpop.xlane.xlu0 %389
        %v391 = vld [vmem:[%s3] sm:$0xff]
        %v392 = vld [vmem:[%s3 + $0x8] sm:$0xff]
        %v393 = vld [vmem:[%s3 + $0x10] sm:$0xff]
        %v394 = vld [vmem:[%s3 + $0x18] sm:$0xff]
        %v396 = vsel %vm342, %v306, 0
        %v399 = vsel %vm342, %v307, 0
        %v402 = vsel %vm342, %v308, 0
        %v405 = vsel %vm342, %v309, 0
        %v408 = vsel %vm342, %v310, 0
        %v411 = vsel %vm342, %v311, 0
        %v414 = vsel %vm342, %v312, 0
        %v417 = vsel %vm342, %v313, 0
        %v420 = vsel %vm342, %v314, 0
        %v423 = vsel %vm342, %v315, 0
        %v426 = vsel %vm342, %v316, 0
        %v429 = vsel %vm342, %v317, 0
        %v432 = vsel %vm342, %v318, 0
        %v435 = vsel %vm342, %v319, 0
        %v438 = vsel %vm342, %v320, 0
        %v441 = vsel %vm342, %v321, 0
        %443 = vmatpush.msra.mxu0 0.0
        %444 = vmatpush.msra.mxu0 0.0
        %445 = vmatpush.msra.mxu0 0.0
        %446 = vmatpush.msra.mxu0 0.0
        %447 = vmatpush.msra.mxu0 0.0
        %448 = vmatpush.msra.mxu0 0.0
        %449 = vmatpush.msra.mxu0 0.0
        %450 = vmatpush.msra.mxu0 0.0
        %451 = vmatpush.msra.mxu0 0.0
        %452 = vmatpush.msra.mxu0 0.0
        %453 = vmatpush.msra.mxu0 0.0
        %454 = vmatpush.msra.mxu0 0.0
        %455 = vmatpush.msra.mxu0 %v394
        %456 = vmatpush.msra.mxu0 %v393
        %457 = vmatpush.msra.mxu0 %v392
        %458 = vmatpush.msra.mxu0 %v391
        %459 = vmatmul.f32.gmra.mxu0 %v396
        %v460 = vpop.f32.mrf.mxu0
        %v461 = vadd.f32 0.0, %v460
        %462 = vmatmul.f32.gmra.mxu0 %v399
        %v463 = vpop.f32.mrf.mxu0
        %v464 = vadd.f32 0.0, %v463
        %465 = vmatmul.f32.gmra.mxu0 %v402
        %v466 = vpop.f32.mrf.mxu0
        %v467 = vadd.f32 0.0, %v466
        %468 = vmatmul.f32.gmra.mxu0 %v405
        %v469 = vpop.f32.mrf.mxu0
        %v470 = vadd.f32 0.0, %v469
        %471 = vmatmul.f32.gmra.mxu0 %v408
        %v472 = vpop.f32.mrf.mxu0
        %v473 = vadd.f32 0.0, %v472
        %474 = vmatmul.f32.gmra.mxu0 %v411
        %v475 = vpop.f32.mrf.mxu0
        %v476 = vadd.f32 0.0, %v475
        %477 = vmatmul.f32.gmra.mxu0 %v414
        %v478 = vpop.f32.mrf.mxu0
        %v479 = vadd.f32 0.0, %v478
        %480 = vmatmul.f32.gmra.mxu0 %v417
        %v481 = vpop.f32.mrf.mxu0
        %v482 = vadd.f32 0.0, %v481
        %483 = vmatmul.f32.gmra.mxu0 %v420
        %v484 = vpop.f32.mrf.mxu0
        %v485 = vadd.f32 0.0, %v484
        %486 = vmatmul.f32.gmra.mxu0 %v423
        %v487 = vpop.f32.mrf.mxu0
        %v488 = vadd.f32 0.0, %v487
        %489 = vmatmul.f32.gmra.mxu0 %v426
        %v490 = vpop.f32.mrf.mxu0
        %v491 = vadd.f32 0.0, %v490
        %492 = vmatmul.f32.gmra.mxu0 %v429
        %v493 = vpop.f32.mrf.mxu0
        %v494 = vadd.f32 0.0, %v493
        %495 = vmatmul.f32.gmra.mxu0 %v432
        %v496 = vpop.f32.mrf.mxu0
        %v497 = vadd.f32 0.0, %v496
        %498 = vmatmul.f32.gmra.mxu0 %v435
        %v499 = vpop.f32.mrf.mxu0
        %v500 = vadd.f32 0.0, %v499
        %501 = vmatmul.f32.gmra.mxu0 %v438
        %v502 = vpop.f32.mrf.mxu0
        %v503 = vadd.f32 0.0, %v502
        %504 = vmatmul.f32.gmra.mxu0 %v441
        %v505 = vpop.f32.mrf.mxu0
        %v506 = vadd.f32 0.0, %v505
        %507 = vdwg.mxu0
        %v508 = vmul.f32 %v461, %v461
        %v509 = vmul.f32 %v464, %v464
        %v510 = vmul.f32 %v467, %v467
        %v511 = vmul.f32 %v470, %v470
        %v512 = vmul.f32 %v473, %v473
        %v513 = vmul.f32 %v476, %v476
        %v514 = vmul.f32 %v479, %v479
        %v515 = vmul.f32 %v482, %v482
        %v516 = vmul.f32 %v485, %v485
        %v517 = vmul.f32 %v488, %v488
        %v518 = vmul.f32 %v491, %v491
        %v519 = vmul.f32 %v494, %v494
        %v520 = vmul.f32 %v497, %v497
        %v521 = vmul.f32 %v500, %v500
        %v522 = vmul.f32 %v503, %v503
        %v523 = vmul.f32 %v506, %v506
        %v524 = vmul.f32 %v306, %v306
        %v525 = vmul.f32 %v307, %v307
        %v526 = vmul.f32 %v308, %v308
        %v527 = vmul.f32 %v309, %v309
        %v528 = vmul.f32 %v310, %v310
        %v529 = vmul.f32 %v311, %v311
        %v530 = vmul.f32 %v312, %v312
        %v531 = vmul.f32 %v313, %v313
        %v532 = vmul.f32 %v314, %v314
        %v533 = vmul.f32 %v315, %v315
        %v534 = vmul.f32 %v316, %v316
        %v535 = vmul.f32 %v317, %v317
        %v536 = vmul.f32 %v318, %v318
        %v537 = vmul.f32 %v319, %v319
        %v538 = vmul.f32 %v320, %v320
        %v539 = vmul.f32 %v321, %v321
        %v540 = vld [vmem:[%s4] sm:$0xff]
        %v541 = vld [vmem:[%s4 + $0x8] sm:$0xff]
        %v542 = vld [vmem:[%s4 + $0x10] sm:$0xff]
        %v543 = vld [vmem:[%s4 + $0x18] sm:$0xff]
        %v545 = vsel %vm342, %v524, 0
        %v548 = vsel %vm342, %v525, 0
        %v551 = vsel %vm342, %v526, 0
        %v554 = vsel %vm342, %v527, 0
        %v557 = vsel %vm342, %v528, 0
        %v560 = vsel %vm342, %v529, 0
        %v563 = vsel %vm342, %v530, 0
        %v566 = vsel %vm342, %v531, 0
        %v569 = vsel %vm342, %v532, 0
        %v572 = vsel %vm342, %v533, 0
        %v575 = vsel %vm342, %v534, 0
        %v578 = vsel %vm342, %v535, 0
        %v581 = vsel %vm342, %v536, 0
        %v584 = vsel %vm342, %v537, 0
        %v587 = vsel %vm342, %v538, 0
        %v590 = vsel %vm342, %v539, 0
        %592 = vmatpush.msra.mxu0 0.0
        %593 = vmatpush.msra.mxu0 0.0
        %594 = vmatpush.msra.mxu0 0.0
        %595 = vmatpush.msra.mxu0 0.0
        %596 = vmatpush.msra.mxu0 0.0
        %597 = vmatpush.msra.mxu0 0.0
        %598 = vmatpush.msra.mxu0 0.0
        %599 = vmatpush.msra.mxu0 0.0
        %600 = vmatpush.msra.mxu0 0.0
        %601 = vmatpush.msra.mxu0 0.0
        %602 = vmatpush.msra.mxu0 0.0
        %603 = vmatpush.msra.mxu0 0.0
        %604 = vmatpush.msra.mxu0 %v543
        %605 = vmatpush.msra.mxu0 %v542
        %606 = vmatpush.msra.mxu0 %v541
        %607 = vmatpush.msra.mxu0 %v540
        %608 = vmatmul.f32.gmra.mxu0 %v545
        %v609 = vpop.f32.mrf.mxu0
        %v610 = vadd.f32 0.0, %v609
        %611 = vmatmul.f32.gmra.mxu0 %v548
        %v612 = vpop.f32.mrf.mxu0
        %v613 = vadd.f32 0.0, %v612
        %614 = vmatmul.f32.gmra.mxu0 %v551
        %v615 = vpop.f32.mrf.mxu0
        %v616 = vadd.f32 0.0, %v615
        %617 = vmatmul.f32.gmra.mxu0 %v554
        %v618 = vpop.f32.mrf.mxu0
        %v619 = vadd.f32 0.0, %v618
        %620 = vmatmul.f32.gmra.mxu0 %v557
        %v621 = vpop.f32.mrf.mxu0
        %v622 = vadd.f32 0.0, %v621
        %623 = vmatmul.f32.gmra.mxu0 %v560
        %v624 = vpop.f32.mrf.mxu0
        %v625 = vadd.f32 0.0, %v624
        %626 = vmatmul.f32.gmra.mxu0 %v563
        %v627 = vpop.f32.mrf.mxu0
        %v628 = vadd.f32 0.0, %v627
        %629 = vmatmul.f32.gmra.mxu0 %v566
        %v630 = vpop.f32.mrf.mxu0
        %v631 = vadd.f32 0.0, %v630
        %632 = vmatmul.f32.gmra.mxu0 %v569
        %v633 = vpop.f32.mrf.mxu0
        %v634 = vadd.f32 0.0, %v633
        %635 = vmatmul.f32.gmra.mxu0 %v572
        %v636 = vpop.f32.mrf.mxu0
        %v637 = vadd.f32 0.0, %v636
        %638 = vmatmul.f32.gmra.mxu0 %v575
        %v639 = vpop.f32.mrf.mxu0
        %v640 = vadd.f32 0.0, %v639
        %641 = vmatmul.f32.gmra.mxu0 %v578
        %v642 = vpop.f32.mrf.mxu0
        %v643 = vadd.f32 0.0, %v642
        %644 = vmatmul.f32.gmra.mxu0 %v581
        %v645 = vpop.f32.mrf.mxu0
        %v646 = vadd.f32 0.0, %v645
        %647 = vmatmul.f32.gmra.mxu0 %v584
        %v648 = vpop.f32.mrf.mxu0
        %v649 = vadd.f32 0.0, %v648
        %650 = vmatmul.f32.gmra.mxu0 %v587
        %v651 = vpop.f32.mrf.mxu0
        %v652 = vadd.f32 0.0, %v651
        %653 = vmatmul.f32.gmra.mxu0 %v590
        %v654 = vpop.f32.mrf.mxu0
        %v655 = vadd.f32 0.0, %v654
        %656 = vdwg.mxu0
        %v657 = vsub.f32 %v508, %v610
        %v658 = vsub.f32 %v509, %v613
        %v659 = vsub.f32 %v510, %v616
        %v660 = vsub.f32 %v511, %v619
        %v661 = vsub.f32 %v512, %v622
        %v662 = vsub.f32 %v513, %v625
        %v663 = vsub.f32 %v514, %v628
        %v664 = vsub.f32 %v515, %v631
        %v665 = vsub.f32 %v516, %v634
        %v666 = vsub.f32 %v517, %v637
        %v667 = vsub.f32 %v518, %v640
        %v668 = vsub.f32 %v519, %v643
        %v669 = vsub.f32 %v520, %v646
        %v670 = vsub.f32 %v521, %v649
        %v671 = vsub.f32 %v522, %v652
        %v672 = vsub.f32 %v523, %v655
        %v673 = vld [vmem:[%s5] sm:$0xff]
        %v674 = vld [vmem:[%s5 + $0x8] sm:$0xff]
        %v675 = vld [vmem:[%s6] sm:$0x1]
        %v677 = vperm.slane %v675, 0
        %vm679 = vcmask 130048
        %v681 = vsel %vm679, %v657, 0
        %v684 = vsel %vm679, %v658, 0
        %v687 = vsel %vm679, %v659, 0
        %v690 = vsel %vm679, %v660, 0
        %v693 = vsel %vm679, %v661, 0
        %v696 = vsel %vm679, %v662, 0
        %v699 = vsel %vm679, %v663, 0
        %v702 = vsel %vm679, %v664, 0
        %v705 = vsel %vm679, %v665, 0
        %v708 = vsel %vm679, %v666, 0
        %v711 = vsel %vm679, %v667, 0
        %v714 = vsel %vm679, %v668, 0
        %v717 = vsel %vm679, %v669, 0
        %v720 = vsel %vm679, %v670, 0
        %v723 = vsel %vm679, %v671, 0
        %v726 = vsel %vm679, %v672, 0
        %728 = vmatpush.msra.mxu0 0.0
        %729 = vmatpush.msra.mxu0 0.0
        %730 = vmatpush.msra.mxu0 0.0
        %731 = vmatpush.msra.mxu0 0.0
        %732 = vmatpush.msra.mxu0 0.0
        %733 = vmatpush.msra.mxu0 0.0
        %734 = vmatpush.msra.mxu0 0.0
        %735 = vmatpush.msra.mxu0 0.0
        %736 = vmatpush.msra.mxu0 0.0
        %737 = vmatpush.msra.mxu0 0.0
        %738 = vmatpush.msra.mxu0 0.0
        %739 = vmatpush.msra.mxu0 0.0
        %740 = vmatpush.msra.mxu0 0.0
        %741 = vmatpush.msra.mxu0 0.0
        %742 = vmatpush.msra.mxu0 %v674
        %743 = vmatpush.msra.mxu0 %v673
        %744 = vmatmul.f32.gmra.mxu0 %v681
        %v745 = vpop.f32.mrf.mxu0
        %v746 = vadd.f32 %v677, %v745
        %747 = vmatmul.f32.gmra.mxu0 %v684
        %v748 = vpop.f32.mrf.mxu0
        %v749 = vadd.f32 %v677, %v748
        %750 = vmatmul.f32.gmra.mxu0 %v687
        %v751 = vpop.f32.mrf.mxu0
        %v752 = vadd.f32 %v677, %v751
        %753 = vmatmul.f32.gmra.mxu0 %v690
        %v754 = vpop.f32.mrf.mxu0
        %v755 = vadd.f32 %v677, %v754
        %756 = vmatmul.f32.gmra.mxu0 %v693
        %v757 = vpop.f32.mrf.mxu0
        %v758 = vadd.f32 %v677, %v757
        %759 = vmatmul.f32.gmra.mxu0 %v696
        %v760 = vpop.f32.mrf.mxu0
        %v761 = vadd.f32 %v677, %v760
        %762 = vmatmul.f32.gmra.mxu0 %v699
        %v763 = vpop.f32.mrf.mxu0
        %v764 = vadd.f32 %v677, %v763
        %765 = vmatmul.f32.gmra.mxu0 %v702
        %v766 = vpop.f32.mrf.mxu0
        %v767 = vadd.f32 %v677, %v766
        %768 = vmatmul.f32.gmra.mxu0 %v705
        %v769 = vpop.f32.mrf.mxu0
        %v770 = vadd.f32 %v677, %v769
        %771 = vmatmul.f32.gmra.mxu0 %v708
        %v772 = vpop.f32.mrf.mxu0
        %v773 = vadd.f32 %v677, %v772
        %774 = vmatmul.f32.gmra.mxu0 %v711
        %v775 = vpop.f32.mrf.mxu0
        %v776 = vadd.f32 %v677, %v775
        %777 = vmatmul.f32.gmra.mxu0 %v714
        %v778 = vpop.f32.mrf.mxu0
        %v779 = vadd.f32 %v677, %v778
        %780 = vmatmul.f32.gmra.mxu0 %v717
        %v781 = vpop.f32.mrf.mxu0
        %v782 = vadd.f32 %v677, %v781
        %783 = vmatmul.f32.gmra.mxu0 %v720
        %v784 = vpop.f32.mrf.mxu0
        %v785 = vadd.f32 %v677, %v784
        %786 = vmatmul.f32.gmra.mxu0 %v723
        %v787 = vpop.f32.mrf.mxu0
        %v788 = vadd.f32 %v677, %v787
        %789 = vmatmul.f32.gmra.mxu0 %v726
        %v790 = vpop.f32.mrf.mxu0
        %v791 = vadd.f32 %v677, %v790
        %792 = vdwg.mxu0
        %v793 = vmax.f32 %v746, 0.0
        %v794 = vmax.f32 %v749, 0.0
        %v795 = vmax.f32 %v752, 0.0
        %v796 = vmax.f32 %v755, 0.0
        %v797 = vmax.f32 %v758, 0.0
        %v798 = vmax.f32 %v761, 0.0
        %v799 = vmax.f32 %v764, 0.0
        %v800 = vmax.f32 %v767, 0.0
        %v801 = vmax.f32 %v770, 0.0
        %v802 = vmax.f32 %v773, 0.0
        %v803 = vmax.f32 %v776, 0.0
        %v804 = vmax.f32 %v779, 0.0
        %v805 = vmax.f32 %v782, 0.0
        %v806 = vmax.f32 %v785, 0.0
        %v807 = vmax.f32 %v788, 0.0
        %v808 = vmax.f32 %v791, 0.0
        %v809 = vld [vmem:[%s7] sm:$0x1]
        %v811 = vperm.slane %v809, 0
        %v813 = vmul.f32 %v793, %v811
        %v814 = vmul.f32 %v794, %v811
        %v815 = vmul.f32 %v795, %v811
        %v816 = vmul.f32 %v796, %v811
        %v817 = vmul.f32 %v797, %v811
        %v818 = vmul.f32 %v798, %v811
        %v819 = vmul.f32 %v799, %v811
        %v820 = vmul.f32 %v800, %v811
        %v821 = vmul.f32 %v801, %v811
        %v822 = vmul.f32 %v802, %v811
        %v823 = vmul.f32 %v803, %v811
        %v824 = vmul.f32 %v804, %v811
        %v825 = vmul.f32 %v805, %v811
        %v826 = vmul.f32 %v806, %v811
        %v827 = vmul.f32 %v807, %v811
        %v828 = vmul.f32 %v808, %v811
        %v829 = vsel %vm679, %v813, 0.0
        %830 = vadd.xlane.f32.xlu0 %v829
        %v831 = vpop.xlane.xlu0 %830
        %v832 = vsel %vm679, %v814, 0.0
        %833 = vadd.xlane.f32.xlu0 %v832
        %v834 = vpop.xlane.xlu0 %833
        %v835 = vsel %vm679, %v815, 0.0
        %836 = vadd.xlane.f32.xlu0 %v835
        %v837 = vpop.xlane.xlu0 %836
        %v838 = vsel %vm679, %v816, 0.0
        %839 = vadd.xlane.f32.xlu0 %v838
        %v840 = vpop.xlane.xlu0 %839
        %v841 = vsel %vm679, %v817, 0.0
        %842 = vadd.xlane.f32.xlu0 %v841
        %v843 = vpop.xlane.xlu0 %842
        %v844 = vsel %vm679, %v818, 0.0
        %845 = vadd.xlane.f32.xlu0 %v844
        %v846 = vpop.xlane.xlu0 %845
        %v847 = vsel %vm679, %v819, 0.0
        %848 = vadd.xlane.f32.xlu0 %v847
        %v849 = vpop.xlane.xlu0 %848
        %v850 = vsel %vm679, %v820, 0.0
        %851 = vadd.xlane.f32.xlu0 %v850
        %v852 = vpop.xlane.xlu0 %851
        %v853 = vsel %vm679, %v821, 0.0
        %854 = vadd.xlane.f32.xlu0 %v853
        %v855 = vpop.xlane.xlu0 %854
        %v856 = vsel %vm679, %v822, 0.0
        %857 = vadd.xlane.f32.xlu0 %v856
        %v858 = vpop.xlane.xlu0 %857
        %v859 = vsel %vm679, %v823, 0.0
        %860 = vadd.xlane.f32.xlu0 %v859
        %v861 = vpop.xlane.xlu0 %860
        %v862 = vsel %vm679, %v824, 0.0
        %863 = vadd.xlane.f32.xlu0 %v862
        %v864 = vpop.xlane.xlu0 %863
        %v865 = vsel %vm679, %v825, 0.0
        %866 = vadd.xlane.f32.xlu0 %v865
        %v867 = vpop.xlane.xlu0 %866
        %v868 = vsel %vm679, %v826, 0.0
        %869 = vadd.xlane.f32.xlu0 %v868
        %v870 = vpop.xlane.xlu0 %869
        %v871 = vsel %vm679, %v827, 0.0
        %872 = vadd.xlane.f32.xlu0 %v871
        %v873 = vpop.xlane.xlu0 %872
        %v874 = vsel %vm679, %v828, 0.0
        %875 = vadd.xlane.f32.xlu0 %v874
        %v876 = vpop.xlane.xlu0 %875
        %v877 = vadd.f32 %v831, %v345
        %v878 = vadd.f32 %v834, %v348
        %v879 = vadd.f32 %v837, %v351
        %v880 = vadd.f32 %v840, %v354
        %v881 = vadd.f32 %v843, %v357
        %v882 = vadd.f32 %v846, %v360
        %v883 = vadd.f32 %v849, %v363
        %v884 = vadd.f32 %v852, %v366
        %v885 = vadd.f32 %v855, %v369
        %v886 = vadd.f32 %v858, %v372
        %v887 = vadd.f32 %v861, %v375
        %v888 = vadd.f32 %v864, %v378
        %v889 = vadd.f32 %v867, %v381
        %v890 = vadd.f32 %v870, %v384
        %v891 = vadd.f32 %v873, %v387
        %v892 = vadd.f32 %v876, %v390
        %s893 = sld [smem:[#allocation2]]
        %v894 = vstv %s893
        %v895 = vadd.f32 %v877, %v894
        %v896 = vadd.f32 %v878, %v894
        %v897 = vadd.f32 %v879, %v894
        %v898 = vadd.f32 %v880, %v894
        %v899 = vadd.f32 %v881, %v894
        %v900 = vadd.f32 %v882, %v894
        %v901 = vadd.f32 %v883, %v894
        %v902 = vadd.f32 %v884, %v894
        %v903 = vadd.f32 %v885, %v894
        %v904 = vadd.f32 %v886, %v894
        %v905 = vadd.f32 %v887, %v894
        %v906 = vadd.f32 %v888, %v894
        %v907 = vadd.f32 %v889, %v894
        %v908 = vadd.f32 %v890, %v894
        %v909 = vadd.f32 %v891, %v894
        %v910 = vadd.f32 %v892, %v894
        %v927 = vlaneseq
        %v928 = vand.u32 %v927, 127
        %v929 = vperm.slane %v895, %v928
        %v930 = vadd.s32 %v928, 4294967288
        %v931 = vperm.slane %v896, %v930
        %vm932 = vcmask 130112
        %v933 = vsel %vm932, %v931, %v929
        %v934 = vadd.s32 %v928, 4294967280
        %v935 = vperm.slane %v897, %v934
        %vm936 = vcmask 195712
        %v937 = vsel %vm936, %v935, %v933
        %v938 = vadd.s32 %v928, 4294967272
        %v939 = vperm.slane %v898, %v938
        %vm940 = vcmask 261312
        %v941 = vsel %vm940, %v939, %v937
        %v942 = vadd.s32 %v928, 4294967264
        %v943 = vperm.slane %v899, %v942
        %vm944 = vcmask 326912
        %v945 = vsel %vm944, %v943, %v941
        %v946 = vadd.s32 %v928, 4294967256
        %v947 = vperm.slane %v900, %v946
        %vm948 = vcmask 392512
        %v949 = vsel %vm948, %v947, %v945
        %v950 = vadd.s32 %v928, 4294967248
        %v951 = vperm.slane %v901, %v950
        %vm952 = vcmask 458112
        %v953 = vsel %vm952, %v951, %v949
        %v954 = vadd.s32 %v928, 4294967240
        %v955 = vperm.slane %v902, %v954
        %vm956 = vcmask 523712
        %v957 = vsel %vm956, %v955, %v953
        %v958 = vadd.s32 %v928, 4294967232
        %v959 = vperm.slane %v903, %v958
        %vm960 = vcmask 589312
        %v961 = vsel %vm960, %v959, %v957
        %v962 = vadd.s32 %v928, 4294967224
        %v963 = vperm.slane %v904, %v962
        %vm964 = vcmask 654912
        %v965 = vsel %vm964, %v963, %v961
        %v966 = vadd.s32 %v928, 4294967216
        %v967 = vperm.slane %v905, %v966
        %vm968 = vcmask 720512
        %v969 = vsel %vm968, %v967, %v965
        %v970 = vadd.s32 %v928, 4294967208
        %v971 = vperm.slane %v906, %v970
        %vm972 = vcmask 786112
        %v973 = vsel %vm972, %v971, %v969
        %v974 = vadd.s32 %v928, 4294967200
        %v975 = vperm.slane %v907, %v974
        %vm976 = vcmask 851712
        %v977 = vsel %vm976, %v975, %v973
        %v978 = vadd.s32 %v928, 4294967192
        %v979 = vperm.slane %v908, %v978
        %vm980 = vcmask 917312
        %v981 = vsel %vm980, %v979, %v977
        %v982 = vadd.s32 %v928, 4294967184
        %v983 = vperm.slane %v909, %v982
        %vm984 = vcmask 982912
        %v985 = vsel %vm984, %v983, %v981
        %v986 = vadd.s32 %v928, 4294967176
        %v987 = vperm.slane %v910, %v986
        %vm988 = vcmask 1048512
        %v989 = vsel %vm988, %v987, %v985
        %991 = vst [vmem:[%s299] sm:$0x1] %v989
        %s992 = sand.u32 %s204, 1
        %s993 = scalar_lea.sflag [#allocation4], %s992
        %s994 = sand.u32 %s204, 1
        %s995 = scalar_lea.vmem [#allocation3], %s994
        // Predicated region
        $region53: #{nfm_forward.1} parent=51 // pred_check
          %p996 = pneg %p214
        $region54: #{nfm_forward.1} parent=51 // pred_check_branch
          %998 = sbr.rel (%p996) target = $region56
        $region55: #{nfm_forward.1} parent=51 // pred_region
          %1000 = vsyncadd %s993, 0
          %s1001 = scalar_lea.hbm %s8, %s23
          %s1003 = sshll.u32 %s995, 4
          %s1004 = int_to_ptr.vmem [resolvable:$true] %s1003
          %s1005 = sshll.u32 %s1001, 4
          %s1006 = int_to_ptr.hbm [resolvable:$true] %s1005
          %1008 = dma.vmem_to_hbm [thread:$0]  %s1004, 16, %s1006, %s993
        $region56: #{nfm_forward.1} parent=51 // pred_fallthru
          _
      $region52: #{nfm_forward.1} parent=5 // pred_fallthru
        _
      %p1009 = scmp.le.s32.totalorder 2, %s18
      // Predicated region
      $region57: #{nfm_forward.1} parent=5 // pred_check
        %p1010 = pneg %p1009
      $region58: #{nfm_forward.1} parent=5 // pred_check_branch
        %1012 = sbr.rel (%p1010) target = $region60
      $region59: #{nfm_forward.1} parent=5 // pred_region
        %s1013 = ssub.s32 %s18, 2
        // Predicated region
        $region61: #{nfm_forward.1} parent=59 // pred_check
          %p1014 = pneg %p220
        $region62: #{nfm_forward.1} parent=59 // pred_check_branch
          %1016 = sbr.rel (%p1014) target = $region64
        $region63: #{nfm_forward.1} parent=59 // pred_region
          %s1017 = sand.u32 %s205, 1
          %s1018 = scalar_lea.sflag [#allocation4], %s1017
          %s1019 = sand.u32 %s205, 1
          %s1020 = scalar_lea.vmem [#allocation3], %s1019
          %1022 = dma.done %s1018, 16
        $region64: #{nfm_forward.1} parent=59 // pred_fallthru
          _
      $region60: #{nfm_forward.1} parent=5 // pred_fallthru
        _
    $region6: #{nfm_forward.1} parent=1 // loop_footer
      %s22 = sadd.s32 1, %s18
    $region7: #{nfm_forward.1} parent=1 // loop_footer_branch
      %17 = sbr.rel target = $region3
    $region8: #{nfm_forward.1} parent=1 // loop_exit
      _
    %1023 = vsyncpa [#allocation4], 1
    %s1024 = scalar_lea.sflag [#allocation4], 1
    %1025 = vsyncpa %s1024, 1

</llo_original>
